<compile_context>
chip_gen: v7x
topology: tpu7x:2x2x1
jax: 0.10.0
libtpu: 0.0.40
codegen_flags: <defaults>
</compile_context>

<pallas_src>
import functools

import jax
import jax.numpy as jnp
from jax.experimental import pallas as pl
from jax.experimental.pallas import tpu as pltpu


def _round_up(v, m):
    return ((v + m - 1) // m) * m


def _pow_gamma(v, gamma):
    """v ** gamma with an explicit multiply chain for small integer gamma."""
    g = float(gamma)
    if g.is_integer() and 0 <= g <= 16:
        ig = int(g)
        if ig == 0:
            return jnp.ones_like(v)
        out = v
        for _ in range(ig - 1):
            out = out * v
        return out
    # TODO(synk): non-integer gamma clamps tiny negative (1 - pt) fp error to 0
    # instead of producing NaN like torch's pow on a negative base would.
    return jnp.power(jnp.maximum(v, 0.0), g)


def _store_partial(out_ref, total):
    # Scalar partial sum goes into lane 0 of a lane-dense (..., 128) block so
    # the wrapper can jnp.sum() the whole partials array with no strided slice.
    lane = jax.lax.broadcasted_iota(jnp.int32, out_ref.shape, len(out_ref.shape) - 1)
    out_ref[...] = jnp.where(lane == 0, total, 0.0).astype(out_ref.dtype)


# -----------------------------------------------------------------------------
# Kernel 1: dense spatial planes, small C.
#   x_ref: (1, C, TR, 128)   t_ref: (1, TR, 128)   a_ref: SMEM (C,) f32
# -----------------------------------------------------------------------------
def _focal_kernel_planes(x_ref, t_ref, a_ref, out_ref, *, gamma, c):
    tt = t_ref[0]                                               # (TR, 128) int32
    planes = [x_ref[0, k].astype(jnp.float32) for k in range(c)]  # C x (TR, 128)

    m = planes[0]
    for k in range(1, c):
        m = jnp.maximum(m, planes[k])

    zeros = jnp.zeros_like(m)
    ez_sum = zeros
    zt = zeros          # z at the target class
    ezt = zeros         # exp(z) at the target class
    at = zeros          # alpha at the target class
    for k in range(c):
        zk = planes[k] - m
        ezk = jnp.exp(zk)
        ez_sum = ez_sum + ezk
        sel = tt == k
        zt = jnp.where(sel, zk, zt)
        ezt = jnp.where(sel, ezk, ezt)
        at = jnp.where(sel, a_ref[k], at)

    lse = jnp.log(ez_sum)
    logpt = zt - lse
    pt = ezt * pl.reciprocal(ez_sum, approx=False)   # reuse the softmax numerator
    focal = _pow_gamma(1.0 - pt, gamma)
    loss = -(focal * at * logpt)
    loss = jnp.where(tt != -1, loss, 0.0)            # ignore_index + ragged padding
    _store_partial(out_ref, jnp.sum(loss))


# -----------------------------------------------------------------------------
# Kernel 2 (fallback): class on sublanes, spatial on lanes.
#   x_ref: (1, C, TL)   t_ref: (1, 1, TL)   a_ref: (1, C, 1)
# -----------------------------------------------------------------------------
def _focal_kernel_sublane(x_ref, t_ref, a_ref, out_ref, *, gamma):
    x = x_ref[...].astype(jnp.float32)               # (1, C, TL)
    t = t_ref[...]                                    # (1, 1, TL)
    a = a_ref[...].astype(jnp.float32)                # (1, C, 1)

    mask = t != -1
    tc = jnp.where(mask, t, 0)

    m = jnp.max(x, axis=1, keepdims=True)
    z = x - m
    ez = jnp.exp(z)
    ez_sum = jnp.sum(ez, axis=1, keepdims=True)
    lse = jnp.log(ez_sum)

    cls = jax.lax.broadcasted_iota(jnp.int32, x.shape, 1)
    onehot = (cls == tc).astype(jnp.float32)
    zt = jnp.sum(z * onehot, axis=1, keepdims=True)
    ezt = jnp.sum(ez * onehot, axis=1, keepdims=True)
    at = jnp.sum(a * onehot, axis=1, keepdims=True)

    logpt = zt - lse
    pt = ezt * pl.reciprocal(ez_sum, approx=False)
    focal = _pow_gamma(1.0 - pt, gamma)
    loss = -(focal * at * logpt)
    loss = jnp.where(mask, loss, 0.0)                 # also kills OOB-garbage lanes
    _store_partial(out_ref, jnp.sum(loss))


def focal_loss_v3(x, target, alpha, *, gamma=2.0, size_average=True,
                  tile_pixels=None, vmem_limit_bytes=32 * 1024 * 1024):
    """JAX/Pallas equivalent of FocalLossV3.forward.

    x:      (N, C, *spatial) float logits (e.g. NCHW) or (M, C) rows
    target: (N, *spatial) / (M,) integer class ids, -1 = ignore
    alpha:  (C,) per-class weights
    """
    if x.ndim > 2:
        n, c = int(x.shape[0]), int(x.shape[1])
        xl = x.reshape(n, c, -1)                       # pure reshape, no copy
        tg = target.reshape(n, -1).astype(jnp.int32)
    else:
        n, c = 1, int(x.shape[1])
        xl = x.T[None, :, :]                           # (M, C) edge case: one transpose
        tg = target.reshape(1, -1).astype(jnp.int32)

    l = int(xl.shape[2])
    # torch's loss.mean() divides by ALL pixels, including ignore_index ones.
    m_total = n * l
    itemsize = jnp.dtype(xl.dtype).itemsize
    alpha_arr = jnp.asarray(alpha, dtype=jnp.float32).reshape(c)

    vmem_budget = (vmem_limit_bytes * 3) // 4          # headroom for pipeline/output
    cparams = pltpu.CompilerParams(
        dimension_semantics=("parallel", "parallel"),
        vmem_limit_bytes=vmem_limit_bytes,
    )

    def cost(num_steps):
        pixels = n * l
        return pl.CostEstimate(
            flops=pixels * (10 * c + 30),
            transcendentals=pixels * (c + 2),
            bytes_accessed=pixels * (c * itemsize + 4) + num_steps * 128 * 4,
        )

    use_planes = (l % 128 == 0) and (c <= 32)

    if use_planes:
        r = l // 128
        if tile_pixels is not None:
            tr = max(8, (int(tile_pixels) // 128) // 8 * 8)
        else:
            # Per-pixel VMEM estimate: double-buffered DMA (logits + int32 target)
            # plus ~(C + 10) live f32 (rows, 128) temporaries inside the kernel.
            per_pixel = 2 * (c * itemsize + 4) + 4 * (c + 10)
            tr = max(8, (vmem_budget // per_pixel // 128) // 8 * 8)
        if n == 1 and r > 8:                           # >= 2 parallel steps for v7x
            tr = min(tr, _round_up(pl.cdiv(r, 2), 8))
        if tr >= r:
            tr = r                                     # single full-extent block
        num_tiles = pl.cdiv(r, tr)

        xp = xl.reshape(n, c, r, 128)                  # free reshape (L contiguous)
        r_pad = num_tiles * tr
        tp = tg
        if r_pad * 128 != l:                           # pad ONLY the small targets
            tp = jnp.pad(tg, ((0, 0), (0, r_pad * 128 - l)), constant_values=-1)
        tp = tp.reshape(n, r_pad, 128)

        kernel = functools.partial(_focal_kernel_planes, gamma=float(gamma), c=c)
        partials = pl.pallas_call(
            kernel,
            out_shape=jax.ShapeDtypeStruct((n, num_tiles, 1, 128), jnp.float32),
            grid=(n, num_tiles),
            in_specs=[
                pl.BlockSpec((1, c, tr, 128), lambda i, j: (i, 0, j, 0)),
                pl.BlockSpec((1, tr, 128), lambda i, j: (i, j, 0)),
                pl.BlockSpec(memory_space=pltpu.MemorySpace.SMEM),
            ],
            out_specs=pl.BlockSpec((1, 1, 1, 128), lambda i, j: (i, j, 0, 0)),
            compiler_params=cparams,
            cost_estimate=cost(n * num_tiles),
        )(xp, tp, alpha_arr)
    else:
        # Fallback: class on the sublane axis, spatial on lanes (large C or
        # L % 128 != 0).  Still no padding/copy of the logits.
        c_pad = _round_up(c, 8)
        if tile_pixels is not None:
            tile_l = max(128, (int(tile_pixels) // 128) * 128)
        else:
            per_pixel = 2 * (c * itemsize + 4) + 4 * (5 * c_pad + 8)
            tile_l = max(128, (vmem_budget // per_pixel // 128) * 128)
        if n == 1 and l > 128:                         # >= 2 parallel steps for v7x
            tile_l = min(tile_l, _round_up(pl.cdiv(l, 2), 128))
        if tile_l >= l:
            tile_l = l
        num_tiles = pl.cdiv(l, tile_l)

        l_pad = num_tiles * tile_l
        tp = tg
        if l_pad != l:                                 # pad ONLY the small targets
            tp = jnp.pad(tg, ((0, 0), (0, l_pad - l)), constant_values=-1)
        tp = tp.reshape(n, 1, l_pad)
        alpha3 = alpha_arr.reshape(1, c, 1)

        kernel = functools.partial(_focal_kernel_sublane, gamma=float(gamma))
        partials = pl.pallas_call(
            kernel,
            out_shape=jax.ShapeDtypeStruct((n, num_tiles, 1, 128), jnp.float32),
            grid=(n, num_tiles),
            in_specs=[
                pl.BlockSpec((1, c, tile_l), lambda i, j: (i, 0, j)),
                pl.BlockSpec((1, 1, tile_l), lambda i, j: (i, 0, j)),
                pl.BlockSpec((1, c, 1), lambda i, j: (0, 0, 0)),
            ],
            out_specs=pl.BlockSpec((1, 1, 1, 128), lambda i, j: (i, j, 0, 0)),
            compiler_params=cparams,
            cost_estimate=cost(n * num_tiles),
        )(xl, tp, alpha3)

    loss_sum = jnp.sum(partials)                       # only lane 0 of each block != 0
    if size_average:
        return loss_sum / jnp.float32(m_total)
    return loss_sum


def _reference(x, target, alpha, gamma=2.0, size_average=True):
    # Pure-JAX mirror of the PyTorch FocalLossV3.forward, for verification.
    n, c = x.shape[0], x.shape[1]
    if x.ndim > 2:
        x2 = x.reshape(n, c, -1).transpose(0, 2, 1).reshape(-1, c)
    else:
        x2 = x
    x2 = x2.astype(jnp.float32)
    t = target.reshape(-1).astype(jnp.int32)
    mask = t != -1
    t = t * mask.astype(jnp.int32)
    logp = jax.nn.log_softmax(x2, axis=1)
    logpt = jnp.take_along_axis(logp, t[:, None], axis=1)[:, 0]
    pt = jnp.exp(logpt)
    at = jnp.asarray(alpha, jnp.float32)[t]
    logpt = logpt * at
    loss = -1.0 * (1.0 - pt) ** gamma * logpt
    loss = loss * mask.astype(jnp.float32)
    return loss.mean() if size_average else loss.sum()


if __name__ == "__main__":
    key = jax.random.PRNGKey(0)
    alpha4 = jnp.array([0.25, 0.5, 0.75, 1.0], dtype=jnp.float32)

    def run_check(idx, n, c, h, w, *, size_average=True, tile_pixels=None):
        k1, k2 = jax.random.split(jax.random.fold_in(key, idx))
        x = jax.random.normal(k1, (n, c, h, w), dtype=jnp.float32)
        target = jax.random.randint(k2, (n, h, w), -1, c)     # -1 = ignore
        alpha = alpha4[:c]
        out = focal_loss_v3(x, target, alpha, gamma=2.0,
                            size_average=size_average, tile_pixels=tile_pixels)
        out = jax.block_until_ready(out)
        ref = _reference(x, target, alpha, gamma=2.0, size_average=size_average)
        assert jnp.allclose(out, ref, atol=1e-5, rtol=3e-4), (idx, out, ref)
        return out

    # 1) Main case: NCHW, small C, L = H*W multiple of 128 -> dense-plane kernel.
    run_check(0, 2, 4, 16, 16)
    # 2) Same shapes with size_average=False (sum reduction).
    run_check(1, 2, 4, 16, 16, size_average=False)
    # 3) Ragged rows in the plane layout (forced small tile): last block reads
    #    OOB logits rows which are masked via -1-padded targets; logits unpadded.
    run_check(2, 2, 4, 48, 48, tile_pixels=1024)
    # 4) L not a multiple of 128 -> class-on-sublane fallback with a ragged
    #    lane tile (targets padded with -1, logits untouched).
    run_check(3, 2, 4, 13, 11, tile_pixels=128)

    print("KERNEL_OK")
</pallas_src>

<mosaic_0001>
module attributes {stable_mosaic.version = 11 : i64} {
  func.func @_focal_kernel_planes(%arg0: i32, %arg1: i32, %arg2: memref<1x4x2x128xf32, #tpu.memory_space<vmem>>, %arg3: memref<1x2x128xi32, #tpu.memory_space<vmem>>, %arg4: memref<4xf32, #tpu.memory_space<smem>>, %arg5: memref<1x1x1x128xf32, #tpu.memory_space<vmem>>) attributes {dimension_semantics = [#tpu.dimension_semantics<parallel>, #tpu.dimension_semantics<parallel>], iteration_bounds = array<i64: 2, 1>, scalar_prefetch = 0 : i64, scratch_operands = 0 : i64, tpu.core_type = #tpu.core_type<tc>, window_params = [{transform_indices = @transform_0, window_bounds = array<i64: 1, 4, 2, 128>}, {transform_indices = @transform_1, window_bounds = array<i64: 1, 2, 128>}, {transform_indices = @transform_2, window_bounds = array<i64: 4>}, {transform_indices = @transform_3, window_bounds = array<i64: 1, 1, 1, 128>}]} {
    %c0 = arith.constant 0 : index
    %c0_0 = arith.constant 0 : index
    %c0_1 = arith.constant 0 : index
    %0 = vector.load %arg3[%c0, %c0_0, %c0_1] : memref<1x2x128xi32, #tpu.memory_space<vmem>>, vector<1x2x128xi32>
    %1 = vector.shape_cast %0 : vector<1x2x128xi32> to vector<2x128xi32>
    %c0_2 = arith.constant 0 : index
    %c0_3 = arith.constant 0 : index
    %c0_4 = arith.constant 0 : index
    %c0_5 = arith.constant 0 : index
    %2 = vector.load %arg2[%c0_2, %c0_3, %c0_4, %c0_5] : memref<1x4x2x128xf32, #tpu.memory_space<vmem>>, vector<1x1x2x128xf32>
    %3 = vector.shape_cast %2 : vector<1x1x2x128xf32> to vector<2x128xf32>
    %c0_6 = arith.constant 0 : index
    %c1 = arith.constant 1 : index
    %c0_7 = arith.constant 0 : index
    %c0_8 = arith.constant 0 : index
    %4 = vector.load %arg2[%c0_6, %c1, %c0_7, %c0_8] : memref<1x4x2x128xf32, #tpu.memory_space<vmem>>, vector<1x1x2x128xf32>
    %5 = vector.shape_cast %4 : vector<1x1x2x128xf32> to vector<2x128xf32>
    %c0_9 = arith.constant 0 : index
    %c2 = arith.constant 2 : index
    %c0_10 = arith.constant 0 : index
    %c0_11 = arith.constant 0 : index
    %6 = vector.load %arg2[%c0_9, %c2, %c0_10, %c0_11] : memref<1x4x2x128xf32, #tpu.memory_space<vmem>>, vector<1x1x2x128xf32>
    %7 = vector.shape_cast %6 : vector<1x1x2x128xf32> to vector<2x128xf32>
    %c0_12 = arith.constant 0 : index
    %c3 = arith.constant 3 : index
    %c0_13 = arith.constant 0 : index
    %c0_14 = arith.constant 0 : index
    %8 = vector.load %arg2[%c0_12, %c3, %c0_13, %c0_14] : memref<1x4x2x128xf32, #tpu.memory_space<vmem>>, vector<1x1x2x128xf32>
    %9 = vector.shape_cast %8 : vector<1x1x2x128xf32> to vector<2x128xf32>
    %10 = arith.maximumf %3, %5 : vector<2x128xf32>
    %11 = arith.maximumf %10, %7 : vector<2x128xf32>
    %12 = arith.maximumf %11, %9 : vector<2x128xf32>
    %cst = arith.constant 0.000000e+00 : f32
    %13 = vector.broadcast %cst : f32 to vector<2x128xf32>
    %14 = arith.subf %3, %12 : vector<2x128xf32>
    %15 = math.exp %14 : vector<2x128xf32>
    %16 = arith.addf %13, %15 : vector<2x128xf32>
    %c0_i32 = arith.constant 0 : i32
    %17 = vector.broadcast %c0_i32 : i32 to vector<2x128xi32>
    %18 = arith.cmpi eq, %1, %17 : vector<2x128xi32>
    %19 = arith.select %18, %14, %13 : vector<2x128xi1>, vector<2x128xf32>
    %20 = arith.select %18, %15, %13 : vector<2x128xi1>, vector<2x128xf32>
    %c0_15 = arith.constant 0 : index
    %21 = memref.load %arg4[%c0_15] : memref<4xf32, #tpu.memory_space<smem>>
    %22 = vector.broadcast %21 : f32 to vector<2x128xf32>
    %23 = arith.select %18, %22, %13 : vector<2x128xi1>, vector<2x128xf32>
    %24 = arith.subf %5, %12 : vector<2x128xf32>
    %25 = math.exp %24 : vector<2x128xf32>
    %26 = arith.addf %16, %25 : vector<2x128xf32>
    %c1_i32 = arith.constant 1 : i32
    %27 = vector.broadcast %c1_i32 : i32 to vector<2x128xi32>
    %28 = arith.cmpi eq, %1, %27 : vector<2x128xi32>
    %29 = arith.select %28, %24, %19 : vector<2x128xi1>, vector<2x128xf32>
    %30 = arith.select %28, %25, %20 : vector<2x128xi1>, vector<2x128xf32>
    %c1_16 = arith.constant 1 : index
    %31 = memref.load %arg4[%c1_16] : memref<4xf32, #tpu.memory_space<smem>>
    %32 = vector.broadcast %31 : f32 to vector<2x128xf32>
    %33 = arith.select %28, %32, %23 : vector<2x128xi1>, vector<2x128xf32>
    %34 = arith.subf %7, %12 : vector<2x128xf32>
    %35 = math.exp %34 : vector<2x128xf32>
    %36 = arith.addf %26, %35 : vector<2x128xf32>
    %c2_i32 = arith.constant 2 : i32
    %37 = vector.broadcast %c2_i32 : i32 to vector<2x128xi32>
    %38 = arith.cmpi eq, %1, %37 : vector<2x128xi32>
    %39 = arith.select %38, %34, %29 : vector<2x128xi1>, vector<2x128xf32>
    %40 = arith.select %38, %35, %30 : vector<2x128xi1>, vector<2x128xf32>
    %c2_17 = arith.constant 2 : index
    %41 = memref.load %arg4[%c2_17] : memref<4xf32, #tpu.memory_space<smem>>
    %42 = vector.broadcast %41 : f32 to vector<2x128xf32>
    %43 = arith.select %38, %42, %33 : vector<2x128xi1>, vector<2x128xf32>
    %44 = arith.subf %9, %12 : vector<2x128xf32>
    %45 = math.exp %44 : vector<2x128xf32>
    %46 = arith.addf %36, %45 : vector<2x128xf32>
    %c3_i32 = arith.constant 3 : i32
    %47 = vector.broadcast %c3_i32 : i32 to vector<2x128xi32>
    %48 = arith.cmpi eq, %1, %47 : vector<2x128xi32>
    %49 = arith.select %48, %44, %39 : vector<2x128xi1>, vector<2x128xf32>
    %50 = arith.select %48, %45, %40 : vector<2x128xi1>, vector<2x128xf32>
    %c3_18 = arith.constant 3 : index
    %51 = memref.load %arg4[%c3_18] : memref<4xf32, #tpu.memory_space<smem>>
    %52 = vector.broadcast %51 : f32 to vector<2x128xf32>
    %53 = arith.select %48, %52, %43 : vector<2x128xi1>, vector<2x128xf32>
    %54 = math.log %46 : vector<2x128xf32>
    %55 = arith.subf %49, %54 : vector<2x128xf32>
    %56 = tpu.reciprocal %46 : vector<2x128xf32> -> vector<2x128xf32>
    %57 = arith.mulf %50, %56 : vector<2x128xf32>
    %cst_19 = arith.constant 1.000000e+00 : f32
    %58 = vector.broadcast %cst_19 : f32 to vector<2x128xf32>
    %59 = arith.subf %58, %57 : vector<2x128xf32>
    %60 = arith.mulf %59, %59 : vector<2x128xf32>
    %61 = arith.mulf %60, %53 : vector<2x128xf32>
    %62 = arith.mulf %61, %55 : vector<2x128xf32>
    %cst_20 = arith.constant 0.000000e+00 : f32
    %63 = vector.broadcast %cst_20 : f32 to vector<2x128xf32>
    %64 = arith.subf %63, %62 : vector<2x128xf32>
    %c-1_i32 = arith.constant -1 : i32
    %65 = vector.broadcast %c-1_i32 : i32 to vector<2x128xi32>
    %66 = arith.cmpi ne, %1, %65 : vector<2x128xi32>
    %cst_21 = arith.constant 0.000000e+00 : f32
    %67 = vector.broadcast %cst_21 : f32 to vector<2x128xf32>
    %68 = arith.select %66, %64, %67 : vector<2x128xi1>, vector<2x128xf32>
    %69 = vector.shape_cast %68 : vector<2x128xf32> to vector<1x2x128xf32>
    %cst_22 = arith.constant dense<0.000000e+00> : vector<1xf32>
    %70 = vector.multi_reduction <add>, %69, %cst_22 [1, 2] : vector<1x2x128xf32> to vector<1xf32>
    %71 = vector.shape_cast %70 : vector<1xf32> to vector<1x1x1xf32>
    %72 = vector.extract %71[0, 0, 0] : f32 from vector<1x1x1xf32>
    %73 = tpu.iota {dimensions = array<i32: 3>} : vector<1x1x1x128xi32>
    %c0_i32_23 = arith.constant 0 : i32
    %74 = vector.broadcast %c0_i32_23 : i32 to vector<1x1x1x128xi32>
    %75 = arith.cmpi eq, %73, %74 : vector<1x1x1x128xi32>
    %cst_24 = arith.constant 0.000000e+00 : f32
    %76 = vector.broadcast %72 : f32 to vector<1x1x1x128xf32>
    %77 = vector.broadcast %cst_24 : f32 to vector<1x1x1x128xf32>
    %78 = arith.select %75, %76, %77 : vector<1x1x1x128xi1>, vector<1x1x1x128xf32>
    %c0_25 = arith.constant 0 : index
    %c0_26 = arith.constant 0 : index
    %c0_27 = arith.constant 0 : index
    %c0_28 = arith.constant 0 : index
    %79 = vector.load %arg5[%c0_25, %c0_26, %c0_27, %c0_28] : memref<1x1x1x128xf32, #tpu.memory_space<vmem>>, vector<1x1x1x128xf32>
    tpu.vector_store %arg5[%c0_25, %c0_26, %c0_27, %c0_28], %78 {strides = array<i32>} : memref<1x1x1x128xf32, #tpu.memory_space<vmem>>, vector<1x1x1x128xf32>,
    return
  }
  func.func @transform_0(%arg0: i32, %arg1: i32) -> (i32, i32, i32, i32) {
    %c0_i32 = arith.constant 0 : i32
    %c0_i32_0 = arith.constant 0 : i32
    %c0_i32_1 = arith.constant 0 : i32
    return %arg0, %c0_i32, %arg1, %c0_i32_0 : i32, i32, i32, i32
  }
  func.func @transform_1(%arg0: i32, %arg1: i32) -> (i32, i32, i32) {
    %c0_i32 = arith.constant 0 : i32
    %c0_i32_0 = arith.constant 0 : i32
    return %arg0, %arg1, %c0_i32 : i32, i32, i32
  }
  func.func @transform_2(%arg0: i32, %arg1: i32) -> i32 {
    %c0_i32 = arith.constant 0 : i32
    %c0_i32_0 = arith.constant 0 : i32
    return %c0_i32 : i32
  }
  func.func @transform_3(%arg0: i32, %arg1: i32) -> (i32, i32, i32, i32) {
    %c0_i32 = arith.constant 0 : i32
    %c0_i32_0 = arith.constant 0 : i32
    %c0_i32_1 = arith.constant 0 : i32
    return %arg0, %arg1, %c0_i32, %c0_i32_0 : i32, i32, i32, i32
  }
}

</mosaic_0001>

<llo_original>
// kernel: tpu_custom_call.1
$region0: #{tpu_custom_call.1}
  #allocation0 [shape = 'u32[]', space=smem, size = 0x4, offset = 0x4, fixed_abs, tag = 'smem constant byte address 0x4 - core index']
  #allocation1 [shape = 'u32[144,128]{1,0:T(1,128)}', space=vmem, size = 0x12000, scoped, tag = 'internal scratch']
  %s0 = inlined_call_operand.hbm [shape: f32[2,4,2,128], index: 0, kind: input, shape index: {}]
  %s1 = inlined_call_operand.hbm [shape: s32[2,2,128], index: 1, kind: input, shape index: {}]
  %s2 = inlined_call_operand.vmem [shape: f32[4], index: 2, kind: input, shape index: {}]
  %s3 = inlined_call_operand.hbm [shape: f32[2,1,1,128], index: 3, kind: output, shape index: {}]
  %s4 = sld [smem:[#allocation0]]
  $region57: #{tpu_custom_call.1} parent=0
    _
  %s6 = ssub.s32 1, %s4
  %s7 = scalar_select 0, %s6, %s4
  $region1: #{tpu_custom_call.1} parent=0
    #allocation2 [shape = 'u8[8192]{0}', space=vmem, size = 0x2000, scoped, tag = 'input window, operand 0']
    #allocation3 [shape = 's32[2]{0}', space=sflag, size = 0x8, scoped, tag = 'scoped memory for tpu_custom_call.1']
    #allocation4 [shape = 's32[2]{0}', space=sflag, size = 0x8, scoped, tag = 'scoped memory for tpu_custom_call.1']
    #allocation5 [shape = 's32[2]{0}', space=sflag, size = 0x8, scoped, tag = 'scoped memory for tpu_custom_call.1']
    #allocation6 [shape = 'u8[2048]{0}', space=vmem, size = 0x800, scoped, tag = 'input window, operand 1']
    #allocation7 [shape = 's32[2]{0}', space=sflag, size = 0x8, scoped, tag = 'scoped memory for tpu_custom_call.1']
    #allocation8 [shape = 'u8[512]{0}', space=smem, size = 0x200, scoped, tag = 'input window, operand 2, single buffered']
    #allocation9 [shape = 'u8[1024]{0}', space=vmem, size = 0x400, scoped, tag = 'output window, operand 0']
    %8 = vsyncpa [#allocation3], 0
    %s9 = scalar_lea.sflag [#allocation3], 1
    %10 = vsyncpa %s9, 0
    %11 = vsyncpa [#allocation7], 0
    %s12 = scalar_lea.sflag [#allocation7], 1
    %13 = vsyncpa %s12, 0
    %14 = vsyncpa [#allocation5], 0
    %15 = vsyncpa [#allocation4], 0
    %s16 = scalar_lea.sflag [#allocation4], 1
    %17 = vsyncpa %s16, 0
    loop: start=0, step=1, limit=4
    $region2: #{tpu_custom_call.1} parent=1 // loop_pre_header
      _
    $region3: #{tpu_custom_call.1} parent=1 // loop_header
      %s19 = sphi 0, %s23
      %p20 = scmp.ge.s32.totalorder %s19, 4
      %s26 = sphi 0, %s38
      %s27 = sphi 0, %s34
      %s28 = sphi 0, %s26
      %s29 = sphi 0, %s27
      %s30 = sphi 0, %s28
      %s31 = sphi 0, %s29
      %s43 = sphi 0, %s45
      %s46 = sphi 0, %s43
      %s47 = sphi 0, %s46
      %s63 = sphi 0, %s47
      %s71 = sphi 0, %s73
      %s74 = sphi 0, %s71
      %s75 = sphi 0, %s74
      %s91 = sphi 0, %s75
      %s95 = sphi 0, %s95
      %s97 = sphi 0, %s95
      %s98 = sphi 0, %s97
      %s112 = sphi 0, %s98
      %s120 = sphi 0, %s122
      %s123 = sphi 0, %s120
      %s124 = sphi 0, %s123
      %s140 = sphi 0, %s124
    $region4: #{tpu_custom_call.1} parent=1 // loop_header_branch
      %22 = sbr.rel (%p20) target = $region8
    $region5: #{tpu_custom_call.1} parent=1 // loop_body
      %s24 = ssub.s32 %s19, 1
      %s25 = ssub.s32 %s19, 2
      %s32 = sadd.s32 1, %s27
      %p33 = scmp.ge.s32.totalorder %s32, 1
      %s34 = scalar_select %p33, 0, %s32
      %s35 = sadd.s32 1, %s26
      %s36 = scalar_select %p33, %s35, %s26
      %p37 = scmp.ge.s32.totalorder %s36, 2
      %s38 = scalar_select %p37, 0, %s36
      %s39 = ssub.s32 %s26, %s38
      %s40 = ssub.s32 %s27, %s34
      %s41 = sor.u32 %s39, %s40
      %p42 = scmp.eq.s32.totalorder %s41, 0
      %s44 = sadd.s32 %s43, 1
      %s45 = scalar_select %p42, %s43, %s44
      %p48 = pneg %p42
      %p49 = scmp.eq.s32.totalorder %s19, 1
      %p50 = por %p48, %p49
      %p51 = scmp.ne.s32.totalorder %s43, %s46
      %p52 = scmp.eq.s32.totalorder %s19, 0
      %p53 = por %p51, %p52
      %p54 = scmp.ne.s32.totalorder %s43, %s46
      %p55 = scmp.eq.s32.totalorder %s24, 1
      %p56 = por %p54, %p55
      %p57 = scmp.ne.s32.totalorder %s46, %s47
      %p58 = scmp.eq.s32.totalorder %s24, 0
      %p59 = por %p57, %p58
      %p60 = scmp.ne.s32.totalorder %s46, %s47
      %p61 = scmp.eq.s32.totalorder %s25, 1
      %p62 = por %p60, %p61
      %p64 = scmp.ne.s32.totalorder %s47, %s63
      %p65 = scmp.eq.s32.totalorder %s25, 0
      %p66 = por %p64, %p65
      %s67 = ssub.s32 %s26, %s38
      %s68 = ssub.s32 %s27, %s34
      %s69 = sor.u32 %s67, %s68
      %p70 = scmp.eq.s32.totalorder %s69, 0
      %s72 = sadd.s32 %s71, 1
      %s73 = scalar_select %p70, %s71, %s72
      %p76 = pneg %p70
      %p77 = scmp.eq.s32.totalorder %s19, 1
      %p78 = por %p76, %p77
      %p79 = scmp.ne.s32.totalorder %s71, %s74
      %p80 = scmp.eq.s32.totalorder %s19, 0
      %p81 = por %p79, %p80
      %p82 = scmp.ne.s32.totalorder %s71, %s74
      %p83 = scmp.eq.s32.totalorder %s24, 1
      %p84 = por %p82, %p83
      %p85 = scmp.ne.s32.totalorder %s74, %s75
      %p86 = scmp.eq.s32.totalorder %s24, 0
      %p87 = por %p85, %p86
      %p88 = scmp.ne.s32.totalorder %s74, %s75
      %p89 = scmp.eq.s32.totalorder %s25, 1
      %p90 = por %p88, %p89
      %p92 = scmp.ne.s32.totalorder %s75, %s91
      %p93 = scmp.eq.s32.totalorder %s25, 0
      %p94 = por %p92, %p93
      %s96 = sadd.s32 %s95, 1
      %p99 = scmp.eq.s32.totalorder %s19, 1
      %p100 = scmp.ne.s32.totalorder %s95, %s97
      %p101 = scmp.eq.s32.totalorder %s19, 0
      %p102 = por %p100, %p101
      %p103 = scmp.ne.s32.totalorder %s95, %s97
      %p104 = scmp.eq.s32.totalorder %s24, 1
      %p105 = por %p103, %p104
      %p106 = scmp.ne.s32.totalorder %s97, %s98
      %p107 = scmp.eq.s32.totalorder %s24, 0
      %p108 = por %p106, %p107
      %p109 = scmp.ne.s32.totalorder %s97, %s98
      %p110 = scmp.eq.s32.totalorder %s25, 1
      %p111 = por %p109, %p110
      %p113 = scmp.ne.s32.totalorder %s98, %s112
      %p114 = scmp.eq.s32.totalorder %s25, 0
      %p115 = por %p113, %p114
      %s116 = ssub.s32 %s26, %s38
      %s117 = ssub.s32 %s27, %s34
      %s118 = sor.u32 %s116, %s117
      %p119 = scmp.eq.s32.totalorder %s118, 0
      %s121 = sadd.s32 %s120, 1
      %s122 = scalar_select %p119, %s120, %s121
      %p125 = pneg %p119
      %p126 = scmp.eq.s32.totalorder %s19, 1
      %p127 = por %p125, %p126
      %p128 = scmp.ne.s32.totalorder %s120, %s123
      %p129 = scmp.eq.s32.totalorder %s19, 0
      %p130 = por %p128, %p129
      %p131 = scmp.ne.s32.totalorder %s120, %s123
      %p132 = scmp.eq.s32.totalorder %s24, 1
      %p133 = por %p131, %p132
      %p134 = scmp.ne.s32.totalorder %s123, %s124
      %p135 = scmp.eq.s32.totalorder %s24, 0
      %p136 = por %p134, %p135
      %p137 = scmp.ne.s32.totalorder %s123, %s124
      %p138 = scmp.eq.s32.totalorder %s25, 1
      %p139 = por %p137, %p138
      %p141 = scmp.ne.s32.totalorder %s124, %s140
      %p142 = scmp.eq.s32.totalorder %s25, 0
      %p143 = por %p141, %p142
      %p144 = scmp.le.s32.totalorder 1, %s19
      %p145 = scmp.lt.s32.totalorder %s19, 3
      %p146 = pnand %p144, %p145
      %p147 = pneg %p146
      // Predicated region
      $region9: #{tpu_custom_call.1} parent=5 // pred_check
        _
      $region10: #{tpu_custom_call.1} parent=5 // pred_check_branch
        %149 = sbr.rel (%p146) target = $region12
      $region11: #{tpu_custom_call.1} parent=5 // pred_region
        %s150 = ssub.s32 %s19, 1
        // Predicated region
        $region13: #{tpu_custom_call.1} parent=11 // pred_check
          %p151 = pneg %p108
        $region14: #{tpu_custom_call.1} parent=11 // pred_check_branch
          %153 = sbr.rel (%p151) target = $region16
        $region15: #{tpu_custom_call.1} parent=11 // pred_region
          %s155 = ssub.s32 16, 16
          %156 = vsyncadd [#allocation5], %s155
          %s158 = sshll.u32 %s2, 4
          %s159 = int_to_ptr.vmem [resolvable:$true] %s158
          %161 = dma.vmem_to_smem %s159, 16, [#allocation8], [#allocation5]
        $region16: #{tpu_custom_call.1} parent=11 // pred_fallthru
          _
      $region12: #{tpu_custom_call.1} parent=5 // pred_fallthru
        _
      %p162 = scmp.lt.s32.totalorder %s19, 2
      // Predicated region
      $region17: #{tpu_custom_call.1} parent=5 // pred_check
        %p163 = pneg %p162
      $region18: #{tpu_custom_call.1} parent=5 // pred_check_branch
        %165 = sbr.rel (%p163) target = $region20
      $region19: #{tpu_custom_call.1} parent=5 // pred_region
        // Predicated region
        $region21: #{tpu_custom_call.1} parent=19 // pred_check
          %p166 = pneg %p53
        $region22: #{tpu_custom_call.1} parent=19 // pred_check_branch
          %168 = sbr.rel (%p166) target = $region24
        $region23: #{tpu_custom_call.1} parent=19 // pred_region
          %s169 = sand.u32 %s43, 1
          %s170 = scalar_lea.sflag [#allocation3], %s169
          %s171 = sand.u32 %s43, 1
          %s172 = smul.addr %s171, 8
          %s173 = scalar_lea.vmem [#allocation2], %s172
          %s175 = ssub.s32 128, 128
          %176 = vsyncadd %s170, %s175
          %s177 = smul.addr %s26, 4
          %s178 = sadd.s32 %s27, %s177
          %s179 = smul.addr %s178, 32
          %s180 = scalar_lea.hbm %s0, %s179
          %s181 = sshll.u32 %s173, 4
          %s182 = int_to_ptr.vmem [resolvable:$true] %s181
          %187 = dma.hbm_to_vmem [thread:$0]  %s180, 128, %s182, %s170, 32, 32, 2
        $region24: #{tpu_custom_call.1} parent=19 // pred_fallthru
          _
        // Predicated region
        $region25: #{tpu_custom_call.1} parent=19 // pred_check
          %p188 = pneg %p81
        $region26: #{tpu_custom_call.1} parent=19 // pred_check_branch
          %190 = sbr.rel (%p188) target = $region28
        $region27: #{tpu_custom_call.1} parent=19 // pred_region
          %s191 = sand.u32 %s71, 1
          %s192 = scalar_lea.sflag [#allocation7], %s191
          %s193 = sand.u32 %s71, 1
          %s194 = smul.addr %s193, 2
          %s195 = scalar_lea.vmem [#allocation6], %s194
          %s197 = ssub.s32 32, 32
          %198 = vsyncadd %s192, %s197
          %s199 = sadd.s32 %s27, %s26
          %s200 = smul.addr %s199, 32
          %s201 = scalar_lea.hbm %s1, %s200
          %s203 = sshll.u32 %s195, 4
          %s204 = int_to_ptr.vmem [resolvable:$true] %s203
          %206 = dma.hbm_to_vmem [thread:$0]  %s201, 32, %s204, %s192
        $region28: #{tpu_custom_call.1} parent=19 // pred_fallthru
          _
      $region20: #{tpu_custom_call.1} parent=5 // pred_fallthru
        _
      %p207 = scmp.le.s32.totalorder 1, %s19
      %p208 = scmp.lt.s32.totalorder %s19, 3
      %p209 = pnand %p207, %p208
      %p210 = pneg %p209
      // Predicated region
      $region29: #{tpu_custom_call.1} parent=5 // pred_check
        _
      $region30: #{tpu_custom_call.1} parent=5 // pred_check_branch
        %212 = sbr.rel (%p209) target = $region32
      $region31: #{tpu_custom_call.1} parent=5 // pred_region
        %s213 = ssub.s32 %s19, 1
        %s214 = sand.u32 %s46, 1
        %s215 = scalar_lea.sflag [#allocation3], %s214
        %s216 = sand.u32 %s46, 1
        %s217 = smul.addr %s216, 8
        %s218 = scalar_lea.vmem [#allocation2], %s217
        // Predicated region
        $region33: #{tpu_custom_call.1} parent=31 // pred_check
          %p219 = pneg %p59
        $region34: #{tpu_custom_call.1} parent=31 // pred_check_branch
          %221 = sbr.rel (%p219) target = $region36
        $region35: #{tpu_custom_call.1} parent=31 // pred_region
          %222 = dma.done %s215, 128
        $region36: #{tpu_custom_call.1} parent=31 // pred_fallthru
          _
        %s223 = sand.u32 %s74, 1
        %s224 = scalar_lea.sflag [#allocation7], %s223
        %s225 = sand.u32 %s74, 1
        %s226 = smul.addr %s225, 2
        %s227 = scalar_lea.vmem [#allocation6], %s226
        // Predicated region
        $region37: #{tpu_custom_call.1} parent=31 // pred_check
          %p228 = pneg %p87
        $region38: #{tpu_custom_call.1} parent=31 // pred_check_branch
          %230 = sbr.rel (%p228) target = $region40
        $region39: #{tpu_custom_call.1} parent=31 // pred_region
          %231 = dma.done %s224, 32
        $region40: #{tpu_custom_call.1} parent=31 // pred_fallthru
          _
        // Predicated region
        $region41: #{tpu_custom_call.1} parent=31 // pred_check
          %p232 = pneg %p108
        $region42: #{tpu_custom_call.1} parent=31 // pred_check_branch
          %234 = sbr.rel (%p232) target = $region44
        $region43: #{tpu_custom_call.1} parent=31 // pred_region
          %235 = dma.done [#allocation5], 16
        $region44: #{tpu_custom_call.1} parent=31 // pred_fallthru
          _
        %236 = sfence
        %s237 = sand.u32 %s46, 1
        %s238 = scalar_lea.sflag [#allocation3], %s237
        %s239 = sand.u32 %s46, 1
        %s240 = smul.addr %s239, 8
        %s241 = scalar_lea.vmem [#allocation2], %s240
        %p242 = pneg %p59
        %p243 = pneg %p56
        %s244 = sand.u32 %s74, 1
        %s245 = scalar_lea.sflag [#allocation7], %s244
        %s246 = sand.u32 %s74, 1
        %s247 = smul.addr %s246, 2
        %s248 = scalar_lea.vmem [#allocation6], %s247
        %p249 = pneg %p87
        %p250 = pneg %p84
        %p251 = pneg %p108
        %p252 = pneg %p105
        %p253 = pneg %p136
        %p254 = pneg %p133
        %s255 = sand.u32 %s123, 1
        %s256 = scalar_lea.sflag [#allocation4], %s255
        %s257 = sand.u32 %s123, 1
        %s258 = scalar_lea.vmem [#allocation9], %s257
        %v259 = vld [vmem:[%s227] sm:$0x3]
        %v260 = vld [vmem:[%s218] sm:$0x3]
        %s261 = scalar_lea.vmem %s218, 2 [#allocation2]
        %v262 = vld [vmem:[%s261] sm:$0x3]
        %s263 = scalar_lea.vmem %s218, 4 [#allocation2]
        %v264 = vld [vmem:[%s263] sm:$0x3]
        %s265 = scalar_lea.vmem %s218, 6 [#allocation2]
        %v266 = vld [vmem:[%s265] sm:$0x3]
        %v267 = vmax.f32 %v260, %v262
        %v268 = vmax.f32 %v267, %v264
        %v269 = vmax.f32 %v268, %v266
        %v270 = vsub.f32 %v260, %v269
        %v271 = vmul.f32 %v270, 1.442695
        %v272 = vpow.pop %v271
        %v273 = vadd.f32 %v272, 0.0
        %vm274 = vcmp.eq.s32.totalorder %v259, 0
        %v275 = vsel %vm274, %v270, 0.0
        %v276 = vsel %vm274, %v272, 0.0
        %s277 = sld [smem:[#allocation8]]
        %v278 = vstv %s277
        %v279 = vsel %vm274, %v278, 0.0
        %v280 = vsub.f32 %v262, %v269
        %v281 = vmul.f32 %v280, 1.442695
        %v282 = vpow.pop %v281
        %v283 = vadd.f32 %v273, %v282
        %vm284 = vcmp.eq.s32.totalorder %v259, 1
        %v285 = vsel %vm284, %v280, %v275
        %v286 = vsel %vm284, %v282, %v276
        %s287 = sld [smem:[#allocation8 + $0x1]]
        %v288 = vstv %s287
        %v289 = vsel %vm284, %v288, %v279
        %v290 = vsub.f32 %v264, %v269
        %v291 = vmul.f32 %v290, 1.442695
        %v292 = vpow.pop %v291
        %v293 = vadd.f32 %v283, %v292
        %vm294 = vcmp.eq.s32.totalorder %v259, 2
        %v295 = vsel %vm294, %v290, %v285
        %v296 = vsel %vm294, %v292, %v286
        %s297 = sld [smem:[#allocation8 + $0x2]]
        %v298 = vstv %s297
        %v299 = vsel %vm294, %v298, %v289
        %v300 = vsub.f32 %v266, %v269
        %v301 = vmul.f32 %v300, 1.442695
        %v302 = vpow.pop %v301
        %v303 = vadd.f32 %v293, %v302
        %vm304 = vcmp.eq.s32.totalorder %v259, 3
        %v305 = vsel %vm304, %v300, %v295
        %v306 = vsel %vm304, %v302, %v296
        %s307 = sld [smem:[#allocation8 + $0x3]]
        %v308 = vstv %s307
        %v309 = vsel %vm304, %v308, %v299
        %v310 = vlog2.pop %v303
        %v311 = vmul.f32 %v310, 0.6931472
        %v312 = vsub.f32 %v305, %v311
        %v313 = vrcp.pop %v303
        %v314 = vmul.f32 %v306, %v313
        %v315 = vsub.f32 1.0, %v314
        %v316 = vmul.f32 %v315, %v315
        %v317 = vmul.f32 %v316, %v309
        %v318 = vmul.f32 %v317, %v312
        %v319 = vsub.f32 0.0, %v318
        %vm320 = vcmp.ne.s32.totalorder %v259, 4294967295
        %v321 = vsel %vm320, %v319, 0.0
        %vm322 = vcmask 1041408
        %v323 = vsel %vm322, %v321, 0.0
        %324 = vadd.xlane.f32.xlu0 %v323
        %v325 = vpop.xlane.xlu0 %324
        %v326 = vrot.slane %v325, 4
        %v327 = vadd.f32 %v325, %v326
        %v328 = vrot.slane %v327, 2
        %v329 = vadd.f32 %v327, %v328
        %v330 = vrot.slane %v329, 1
        %v331 = vadd.f32 %v329, %v330
        %s332 = vtos %v331
        %v333 = vlaneseq
        %v334 = vand.u32 %v333, 127
        %vm335 = vcmp.eq.s32.totalorder %v334, 0
        %v336 = vstv %s332
        %v337 = vsel %vm335, %v336, 0.0
        %338 = vst [vmem:[%s258] sm:$0x1] %v337
        %s339 = sand.u32 %s123, 1
        %s340 = scalar_lea.sflag [#allocation4], %s339
        %s341 = sand.u32 %s123, 1
        %s342 = scalar_lea.vmem [#allocation9], %s341
        // Predicated region
        $region45: #{tpu_custom_call.1} parent=31 // pred_check
          %p343 = pneg %p133
        $region46: #{tpu_custom_call.1} parent=31 // pred_check_branch
          %345 = sbr.rel (%p343) target = $region48
        $region47: #{tpu_custom_call.1} parent=31 // pred_region
          %s347 = ssub.s32 16, 16
          %348 = vsyncadd %s340, %s347
          %s349 = sadd.s32 %s29, %s28
          %s350 = smul.addr %s349, 16
          %s351 = scalar_lea.hbm %s3, %s350
          %s353 = sshll.u32 %s342, 4
          %s354 = int_to_ptr.vmem [resolvable:$true] %s353
          %356 = dma.vmem_to_hbm [thread:$0]  %s354, 16, %s351, %s340
        $region48: #{tpu_custom_call.1} parent=31 // pred_fallthru
          _
      $region32: #{tpu_custom_call.1} parent=5 // pred_fallthru
        _
      %p357 = scmp.le.s32.totalorder 2, %s19
      // Predicated region
      $region49: #{tpu_custom_call.1} parent=5 // pred_check
        %p358 = pneg %p357
      $region50: #{tpu_custom_call.1} parent=5 // pred_check_branch
        %360 = sbr.rel (%p358) target = $region52
      $region51: #{tpu_custom_call.1} parent=5 // pred_region
        %s361 = ssub.s32 %s19, 2
        // Predicated region
        $region53: #{tpu_custom_call.1} parent=51 // pred_check
          %p362 = pneg %p139
        $region54: #{tpu_custom_call.1} parent=51 // pred_check_branch
          %364 = sbr.rel (%p362) target = $region56
        $region55: #{tpu_custom_call.1} parent=51 // pred_region
          %s365 = sand.u32 %s124, 1
          %s366 = scalar_lea.sflag [#allocation4], %s365
          %s367 = sand.u32 %s124, 1
          %s368 = scalar_lea.vmem [#allocation9], %s367
          %369 = dma.done %s366, 16
        $region56: #{tpu_custom_call.1} parent=51 // pred_fallthru
          _
      $region52: #{tpu_custom_call.1} parent=5 // pred_fallthru
        _
    $region6: #{tpu_custom_call.1} parent=1 // loop_footer
      %s23 = sadd.s32 1, %s19
    $region7: #{tpu_custom_call.1} parent=1 // loop_footer_branch
      %18 = sbr.rel target = $region3
    $region8: #{tpu_custom_call.1} parent=1 // loop_exit
      _
    %370 = vsyncpa [#allocation3], 1
    %s371 = scalar_lea.sflag [#allocation3], 1
    %372 = vsyncpa %s371, 1
    %373 = vsyncpa [#allocation7], 1
    %s374 = scalar_lea.sflag [#allocation7], 1
    %375 = vsyncpa %s374, 1
    %376 = vsyncpa [#allocation4], 1
    %s377 = scalar_lea.sflag [#allocation4], 1
    %378 = vsyncpa %s377, 1
    %379 = vsyncpa [#allocation5], 1
    %s380 = scalar_lea.sflag [#allocation5], 1
    %381 = vsyncpa %s380, 1

</llo_original>
